<compile_context>
chip_gen: v5e
topology: v5e:2x2
jax: 0.10.0
libtpu: 0.0.40
codegen_flags: <defaults>
</compile_context>

<pallas_src>
import jax
import jax.numpy as jnp
from jax.experimental import pallas as pl
from jax.experimental.pallas import tpu as pltpu

_MIB = 1024 * 1024


def vq_kernel(x_ref, e_aug_ref, e_t_ref, q_ref, sse_ref):
    x = x_ref[0]                               # [D, T]   (lane axis = spatial)
    e_aug = e_aug_ref[...]                     # [K, Dp]  codebook + bias column
    e_t = e_t_ref[...]                         # [D, K]   f32 (exact gather)

    K, Dp = e_aug.shape
    D, T = x.shape
    mm_dtype = e_aug.dtype

    x_f32 = x.astype(jnp.float32)              # needed for the SSE path
    x_mm = x if x.dtype == mm_dtype else x.astype(mm_dtype)

    # Augmented rows: first pad row is all-ones (multiplies the -0.5*||e||^2
    # bias column of e_aug), remaining pad rows are zeros.
    pad = Dp - D
    pad_iota = jax.lax.broadcasted_iota(jnp.int32, (pad, T), 0)
    pad_rows = (pad_iota == 0).astype(mm_dtype)
    x_aug = jnp.concatenate([x_mm, pad_rows], axis=0)          # [Dp, T]

    # scores_k = e_k . x - 0.5*||e_k||^2  =>  argmax(scores) == argmin(dist).
    scores = jnp.dot(e_aug, x_aug, preferred_element_type=jnp.float32)  # [K, T]

    # First-occurrence argmax along K (matches torch.argmin's tie rule).
    # NOTE: if a column were all-NaN, the mask is empty and the column
    # quantizes to 0 (torch.argmin would still pick an index).
    max_s = jnp.max(scores, axis=0, keepdims=True)                       # [1, T]
    iota_k = jax.lax.broadcasted_iota(jnp.int32, (K, T), 0)
    inds = jnp.min(jnp.where(scores >= max_s, iota_k, K),
                   axis=0, keepdims=True)                                # [1, T]
    one_hot = (iota_k == inds).astype(jnp.float32)                       # [K, T]

    # Codebook gather via MXU: e^T @ one_hot -> [D, T] (contraction over K).
    quant = jnp.dot(e_t, one_hot, preferred_element_type=jnp.float32)
    q_ref[...] = quant[None].astype(q_ref.dtype)

    # Lane-dense partial SSE: reduce only over D (sublanes); the wrapper sums
    # over lanes and tiles.
    diff = quant - x_f32
    sse_ref[...] = jnp.sum(diff * diff, axis=0, keepdims=True)[None, None]


def _tile_vmem_bytes(tile_hw, D, Dp, K, in_isz, out_isz, mm_isz):
    """Conservative per-step VMEM working-set estimate."""
    T = tile_hw
    io = 2 * D * T * (in_isz + out_isz)                # x + q tiles, double-buffered
    codebook = 2 * (K * Dp * mm_isz + D * K * 4)       # e_aug + e_t, double-buffered
    sse = 2 * T * 4                                    # partial-SSE tile
    interm = (3 * K * T + 3 * D * T + Dp * T) * 4      # scores/iota/one_hot + x_aug/quant/diff
    return io + codebook + sse + interm


def _default_vmem_budget_bytes():
    """Working-set budget used to pick the spatial tile (generation aware)."""
    try:
        kind = jax.devices()[0].device_kind.lower()
    except Exception:
        kind = ""
    if any(tag in kind for tag in ("v4", "v5", "v6")):
        return 40 * _MIB       # 128 MiB-VMEM parts: bigger tiles are fine
    return 26 * _MIB           # conservative default (covers 64 MiB-VMEM parts, e.g. v7x)


def _choose_tile_hw(hw, batch, max_tile, fits):
    """Largest lane-dense (multiple-of-128) divisor of hw within the VMEM
    budget, preferring tilings that yield >= 2 grid programs (megacore)."""
    cands = [d for d in range(128, min(hw, max_tile) + 1, 128) if hw % d == 0]
    if hw <= max_tile:
        cands.append(hw)       # full-extent tile is always layout-legal
    if not cands:
        cands = [hw]
    cands = sorted(set(cands))
    fitting = [d for d in cands if fits(d)]
    pool = fitting if fitting else cands               # last resort: ignore the budget
    multi = [d for d in pool if batch * (hw // d) >= 2]
    return max(multi if multi else pool)


def vector_quantize(latents_nchw, embedding, beta=0.25, max_tile_hw=2048,
                    bf16_scores=False, out_dtype=None, vmem_budget_bytes=None):
    """Forward pass of VectorQuantizer.

    Args:
      latents_nchw: [B, D, H, W] float (PyTorch NCHW convention).
      embedding:    [K, D] float codebook.
      bf16_scores:  run the distance matmul in bf16 (may flip near-tie indices).
      out_dtype:    dtype of the quantized output (default: input dtype); bf16
                    halves writeback traffic on HBM-bound parts.
    Returns:
      (quantized [B, D, H, W], vq_loss scalar)
    """
    B, D, H, W = latents_nchw.shape
    K, D_e = embedding.shape
    assert D == D_e, "channel dim must equal embedding_dim"
    HW = H * W
    # TODO(synk): for HW < 128 the output stores become masked (vst.msk); pack
    # several batch elements per grid step if that regime matters.

    q_dtype = latents_nchw.dtype if out_dtype is None else out_dtype
    mm_dtype = jnp.bfloat16 if bf16_scores else jnp.float32

    Dp = -((-(D + 1)) // 8) * 8                 # contraction dim D+1 padded to mult of 8
    in_isz = jnp.dtype(latents_nchw.dtype).itemsize
    out_isz = jnp.dtype(q_dtype).itemsize
    mm_isz = jnp.dtype(mm_dtype).itemsize

    budget = _default_vmem_budget_bytes() if vmem_budget_bytes is None else vmem_budget_bytes
    fits = lambda t: _tile_vmem_bytes(t, D, Dp, K, in_isz, out_isz, mm_isz) <= budget
    tile_hw = _choose_tile_hw(HW, B, max_tile_hw, fits)
    n_hw = HW // tile_hw

    # Free reshape (NCHW is already contiguous as [B, D, H*W]); no transpose.
    x = latents_nchw.reshape(B, D, HW)

    # Hoisted, loop-invariant codebook quantities (tiny: ~K*D floats each).
    emb = embedding.astype(jnp.float32)
    e_sq = jnp.sum(emb * emb, axis=1, keepdims=True)           # [K, 1]
    pad_cols = Dp - D - 1
    e_aug = jnp.concatenate(
        [emb, -0.5 * e_sq, jnp.zeros((K, pad_cols), jnp.float32)], axis=1
    ).astype(mm_dtype)                                          # [K, Dp]
    e_t = emb.T                                                 # [D, K] f32

    est = _tile_vmem_bytes(tile_hw, D, Dp, K, in_isz, out_isz, mm_isz)
    vmem_limit = int(min(48 * _MIB, max(est + 16 * _MIB, 32 * _MIB)))

    q, sse_part = pl.pallas_call(
        vq_kernel,
        out_shape=(
            jax.ShapeDtypeStruct((B, D, HW), q_dtype),
            jax.ShapeDtypeStruct((B, n_hw, 1, tile_hw), jnp.float32),
        ),
        grid_spec=pltpu.PrefetchScalarGridSpec(
            num_scalar_prefetch=0,
            grid=(B, n_hw),
            in_specs=[
                pl.BlockSpec((1, D, tile_hw), lambda b, j: (b, 0, j)),   # latents
                pl.BlockSpec((K, Dp), lambda b, j: (0, 0)),              # codebook + bias col
                pl.BlockSpec((D, K), lambda b, j: (0, 0)),               # codebook^T
            ],
            out_specs=[
                pl.BlockSpec((1, D, tile_hw), lambda b, j: (b, 0, j)),       # quantized
                pl.BlockSpec((1, 1, 1, tile_hw), lambda b, j: (b, j, 0, 0)),  # partial SSE
            ],
        ),
        compiler_params=pltpu.CompilerParams(
            dimension_semantics=("parallel", "parallel"),
            vmem_limit_bytes=vmem_limit,
        ),
    )(x, e_aug, e_t)

    # Deferred loss reduction: forward value of
    #   beta * commitment + embedding == (1 + beta) * MSE.
    total_sse = jnp.sum(sse_part)
    mse = total_sse / float(B * D * HW)
    vq_loss = (1.0 + beta) * mse

    # TODO(synk): forward-only; wrap with jax.custom_vjp to reproduce the
    # straight-through estimator and the detach() split of the two loss terms
    # before using this in training.
    return q.reshape(B, D, H, W), vq_loss


def _vq_reference(lat, emb, beta):
    """Pure-JAX mirror of the PyTorch forward (for verification)."""
    Bv, Dv, Hv, Wv = lat.shape
    x = jnp.transpose(lat, (0, 2, 3, 1)).reshape(-1, Dv)
    dist = (jnp.sum(x * x, axis=1, keepdims=True)
            + jnp.sum(emb * emb, axis=1) - 2.0 * (x @ emb.T))
    idx = jnp.argmin(dist, axis=1)
    qf = emb[idx]
    mse = jnp.mean((qf - x) ** 2)
    q_nchw = qf.reshape(Bv, Hv, Wv, Dv).transpose(0, 3, 1, 2)
    return q_nchw, (1.0 + beta) * mse


if __name__ == "__main__":
    key = jax.random.PRNGKey(0)
    k_lat, k_emb = jax.random.split(key)

    B, D, H, W = 2, 64, 16, 16   # channels == embedding_dim D
    K = 128                       # num_embeddings
    beta = 0.25

    latents = jax.random.normal(k_lat, (B, D, H, W), dtype=jnp.float32)
    # nn.Embedding weight init: uniform(-1/K, 1/K), shape [K, D]
    embedding = jax.random.uniform(
        k_emb, (K, D), minval=-1.0 / K, maxval=1.0 / K, dtype=jnp.float32
    )

    quantized, vq_loss = vector_quantize(latents, embedding, beta=beta)
    jax.block_until_ready((quantized, vq_loss))

    assert quantized.shape == (B, D, H, W)
    assert vq_loss.shape == ()

    q_ref, loss_ref = _vq_reference(latents, embedding, beta)
    assert jnp.allclose(quantized, q_ref, atol=1e-5, rtol=1e-5), "quantized mismatch"
    assert jnp.allclose(vq_loss, loss_ref, atol=1e-5, rtol=1e-4), "loss mismatch"

    print("KERNEL_OK")
</pallas_src>

<mosaic_0001>
module attributes {stable_mosaic.version = 11 : i64} {
  func.func @vq_kernel(%arg0: i32, %arg1: i32, %arg2: memref<1x64x256xf32, #tpu.memory_space<vmem>>, %arg3: memref<128x72xf32, #tpu.memory_space<vmem>>, %arg4: memref<64x128xf32, #tpu.memory_space<vmem>>, %arg5: memref<1x64x256xf32, #tpu.memory_space<vmem>>, %arg6: memref<1x1x1x256xf32, #tpu.memory_space<vmem>>) attributes {dimension_semantics = [#tpu.dimension_semantics<parallel>, #tpu.dimension_semantics<parallel>], iteration_bounds = array<i64: 2, 1>, scalar_prefetch = 0 : i64, scratch_operands = 0 : i64, tpu.core_type = #tpu.core_type<tc>, window_params = [{transform_indices = @transform_0, window_bounds = array<i64: 1, 64, 256>}, {pipeline_mode = #tpu.pipeline_mode<synchronous>, transform_indices = @transform_1, window_bounds = array<i64: 128, 72>}, {pipeline_mode = #tpu.pipeline_mode<synchronous>, transform_indices = @transform_2, window_bounds = array<i64: 64, 128>}, {transform_indices = @transform_3, window_bounds = array<i64: 1, 64, 256>}, {transform_indices = @transform_4, window_bounds = array<i64: 1, 1, 1, 256>}]} {
    %c0 = arith.constant 0 : index
    %c0_0 = arith.constant 0 : index
    %c0_1 = arith.constant 0 : index
    %0 = vector.load %arg2[%c0, %c0_0, %c0_1] : memref<1x64x256xf32, #tpu.memory_space<vmem>>, vector<1x64x256xf32>
    %1 = vector.shape_cast %0 : vector<1x64x256xf32> to vector<64x256xf32>
    %c0_2 = arith.constant 0 : index
    %c0_3 = arith.constant 0 : index
    %2 = vector.load %arg3[%c0_2, %c0_3] : memref<128x72xf32, #tpu.memory_space<vmem>>, vector<128x72xf32>
    %c0_4 = arith.constant 0 : index
    %c0_5 = arith.constant 0 : index
    %3 = vector.load %arg4[%c0_4, %c0_5] : memref<64x128xf32, #tpu.memory_space<vmem>>, vector<64x128xf32>
    %4 = tpu.iota {dimensions = array<i32: 0>} : vector<8x256xi32>
    %c0_i32 = arith.constant 0 : i32
    %5 = vector.broadcast %c0_i32 : i32 to vector<8x256xi32>
    %6 = arith.cmpi eq, %4, %5 : vector<8x256xi32>
    %7 = arith.extui %6 : vector<8x256xi1> to vector<8x256xi32>
    %8 = arith.sitofp %7 : vector<8x256xi32> to vector<8x256xf32>
    %9 = tpu.concatenate %1, %8 in 0 : vector<64x256xf32>, vector<8x256xf32> -> vector<72x256xf32>
    %cst = arith.constant dense<0.000000e+00> : vector<128x256xf32>
    %10 = tpu.matmul %2, %9, %cst {dimension_numbers = #tpu.dot_dimension_numbers<[1], [0], [0], [1], [0, 0, 1, 1], [], []>} : vector<128x72xf32>, vector<72x256xf32>, vector<128x256xf32> -> vector<128x256xf32>
    %cst_6 = arith.constant dense<0xFF800000> : vector<256xf32>
    %11 = vector.multi_reduction <maximumf>, %10, %cst_6 [0] : vector<128x256xf32> to vector<256xf32>
    %12 = vector.shape_cast %11 : vector<256xf32> to vector<1x256xf32>
    %13 = tpu.iota {dimensions = array<i32: 0>} : vector<128x256xi32>
    %14 = vector.broadcast %12 : vector<1x256xf32> to vector<128x256xf32>
    %15 = arith.cmpf oge, %10, %14 : vector<128x256xf32>
    %c128_i32 = arith.constant 128 : i32
    %16 = vector.broadcast %c128_i32 : i32 to vector<128x256xi32>
    %17 = arith.select %15, %13, %16 : vector<128x256xi1>, vector<128x256xi32>
    %cst_7 = arith.constant dense<2147483647> : vector<256xi32>
    %18 = vector.multi_reduction <minsi>, %17, %cst_7 [0] : vector<128x256xi32> to vector<256xi32>
    %19 = vector.shape_cast %18 : vector<256xi32> to vector<1x256xi32>
    %20 = vector.broadcast %19 : vector<1x256xi32> to vector<128x256xi32>
    %21 = arith.cmpi eq, %13, %20 : vector<128x256xi32>
    %22 = arith.extui %21 : vector<128x256xi1> to vector<128x256xi32>
    %23 = arith.sitofp %22 : vector<128x256xi32> to vector<128x256xf32>
    %cst_8 = arith.constant dense<0.000000e+00> : vector<64x256xf32>
    %24 = tpu.matmul %3, %23, %cst_8 {dimension_numbers = #tpu.dot_dimension_numbers<[1], [0], [0], [1], [0, 0, 1, 1], [], []>} : vector<64x128xf32>, vector<128x256xf32>, vector<64x256xf32> -> vector<64x256xf32>
    %25 = vector.shape_cast %24 : vector<64x256xf32> to vector<1x64x256xf32>
    %c0_9 = arith.constant 0 : index
    %c0_10 = arith.constant 0 : index
    %c0_11 = arith.constant 0 : index
    %26 = vector.load %arg5[%c0_9, %c0_10, %c0_11] : memref<1x64x256xf32, #tpu.memory_space<vmem>>, vector<1x64x256xf32>
    tpu.vector_store %arg5[%c0_9, %c0_10, %c0_11], %25 {strides = array<i32>} : memref<1x64x256xf32, #tpu.memory_space<vmem>>, vector<1x64x256xf32>,
    %27 = arith.subf %24, %1 : vector<64x256xf32>
    %28 = arith.mulf %27, %27 : vector<64x256xf32>
    %cst_12 = arith.constant dense<0.000000e+00> : vector<256xf32>
    %29 = vector.multi_reduction <add>, %28, %cst_12 [0] : vector<64x256xf32> to vector<256xf32>
    %30 = vector.shape_cast %29 : vector<256xf32> to vector<1x256xf32>
    %31 = vector.shape_cast %30 : vector<1x256xf32> to vector<1x1x1x256xf32>
    %c0_13 = arith.constant 0 : index
    %c0_14 = arith.constant 0 : index
    %c0_15 = arith.constant 0 : index
    %c0_16 = arith.constant 0 : index
    %32 = vector.load %arg6[%c0_13, %c0_14, %c0_15, %c0_16] : memref<1x1x1x256xf32, #tpu.memory_space<vmem>>, vector<1x1x1x256xf32>
    tpu.vector_store %arg6[%c0_13, %c0_14, %c0_15, %c0_16], %31 {strides = array<i32>} : memref<1x1x1x256xf32, #tpu.memory_space<vmem>>, vector<1x1x1x256xf32>,
    return
  }
  func.func @transform_0(%arg0: i32, %arg1: i32) -> (i32, i32, i32) {
    %c0_i32 = arith.constant 0 : i32
    %c0_i32_0 = arith.constant 0 : i32
    return %arg0, %c0_i32, %arg1 : i32, i32, i32
  }
  func.func @transform_1(%arg0: i32, %arg1: i32) -> (i32, i32) {
    %c0_i32 = arith.constant 0 : i32
    %c0_i32_0 = arith.constant 0 : i32
    %c0_i32_1 = arith.constant 0 : i32
    return %c0_i32, %c0_i32_0 : i32, i32
  }
  func.func @transform_2(%arg0: i32, %arg1: i32) -> (i32, i32) {
    %c0_i32 = arith.constant 0 : i32
    %c0_i32_0 = arith.constant 0 : i32
    %c0_i32_1 = arith.constant 0 : i32
    return %c0_i32, %c0_i32_0 : i32, i32
  }
  func.func @transform_3(%arg0: i32, %arg1: i32) -> (i32, i32, i32) {
    %c0_i32 = arith.constant 0 : i32
    %c0_i32_0 = arith.constant 0 : i32
    return %arg0, %c0_i32, %arg1 : i32, i32, i32
  }
  func.func @transform_4(%arg0: i32, %arg1: i32) -> (i32, i32, i32, i32) {
    %c0_i32 = arith.constant 0 : i32
    %c0_i32_0 = arith.constant 0 : i32
    %c0_i32_1 = arith.constant 0 : i32
    return %arg0, %arg1, %c0_i32, %c0_i32_0 : i32, i32, i32, i32
  }
}

</mosaic_0001>

<llo_original>
// kernel: tpu_custom_call.1
$region0: #{tpu_custom_call.1}
  #allocation0 [shape = 'u32[]', space=smem, size = 0x4, offset = 0x4, fixed_abs, tag = 'smem constant byte address 0x4 - core index']
  #allocation1 [shape = 'u32[72,128]{1,0:T(1,128)}', space=vmem, size = 0x9000, scoped, tag = 'internal scratch']
  %s0 = inlined_call_operand.hbm [shape: f32[2,64,256], index: 0, kind: input, shape index: {}]
  %s1 = inlined_call_operand.vmem [shape: f32[128,72], index: 1, kind: input, shape index: {}]
  %s2 = inlined_call_operand.vmem [shape: f32[64,128], index: 2, kind: input, shape index: {}]
  %s3 = inlined_call_operand.hbm [shape: f32[2,64,256], index: 3, kind: output, shape index: {0}]
  %s4 = inlined_call_operand.hbm [shape: f32[2,1,1,256], index: 4, kind: output, shape index: {1}]
  %5 = xla_tuple %s3, %s4
  %s6 = sld [smem:[#allocation0]]
  $region57: #{tpu_custom_call.1} parent=0
    _
  %s8 = ssub.s32 1, %s6
  %s9 = scalar_select 0, %s8, %s6
  $region1: #{tpu_custom_call.1} parent=0
    #allocation2 [shape = 'u8[131072]{0}', space=vmem, size = 0x20000, scoped, tag = 'input window, operand 0']
    #allocation3 [shape = 's32[2]{0}', space=sflag, size = 0x8, scoped, tag = 'scoped memory for tpu_custom_call.1']
    #allocation4 [shape = 's32[2]{0}', space=sflag, size = 0x8, scoped, tag = 'scoped memory for tpu_custom_call.1']
    #allocation5 [shape = 'u8[131072]{0}', space=vmem, size = 0x20000, scoped, tag = 'output window, operand 0']
    #allocation6 [shape = 'u8[2048]{0}', space=vmem, size = 0x800, scoped, tag = 'output window, operand 1']
    #allocation7 [shape = 's32[2]{0}', space=sflag, size = 0x8, scoped, tag = 'scoped memory for tpu_custom_call.1']
    %10 = vsyncpa [#allocation3], 0
    %s11 = scalar_lea.sflag [#allocation3], 1
    %12 = vsyncpa %s11, 0
    %13 = vsyncpa [#allocation4], 0
    %s14 = scalar_lea.sflag [#allocation4], 1
    %15 = vsyncpa %s14, 0
    %16 = vsyncpa [#allocation7], 0
    %s17 = scalar_lea.sflag [#allocation7], 1
    %18 = vsyncpa %s17, 0
    loop: start=0, step=1, limit=4
    $region2: #{tpu_custom_call.1} parent=1 // loop_pre_header
      _
    $region3: #{tpu_custom_call.1} parent=1 // loop_header
      %s20 = sphi 0, %s24
      %p21 = scmp.ge.s32.totalorder %s20, 4
      %s27 = sphi 0, %s39
      %s28 = sphi 0, %s35
      %s29 = sphi 0, %s27
      %s30 = sphi 0, %s28
      %s31 = sphi 0, %s29
      %s32 = sphi 0, %s30
      %s44 = sphi 0, %s46
      %s47 = sphi 0, %s44
      %s48 = sphi 0, %s47
      %s64 = sphi 0, %s48
      %s68 = sphi 0, %s68
      %s70 = sphi 0, %s68
      %s71 = sphi 0, %s70
      %s85 = sphi 0, %s71
      %s89 = sphi 0, %s89
      %s91 = sphi 0, %s89
      %s92 = sphi 0, %s91
      %s106 = sphi 0, %s92
      %s114 = sphi 0, %s116
      %s117 = sphi 0, %s114
      %s118 = sphi 0, %s117
      %s134 = sphi 0, %s118
      %s142 = sphi 0, %s144
      %s145 = sphi 0, %s142
      %s146 = sphi 0, %s145
      %s162 = sphi 0, %s146
    $region4: #{tpu_custom_call.1} parent=1 // loop_header_branch
      %23 = sbr.rel (%p21) target = $region8
    $region5: #{tpu_custom_call.1} parent=1 // loop_body
      %s25 = ssub.s32 %s20, 1
      %s26 = ssub.s32 %s20, 2
      %s33 = sadd.s32 1, %s28
      %p34 = scmp.ge.s32.totalorder %s33, 1
      %s35 = scalar_select %p34, 0, %s33
      %s36 = sadd.s32 1, %s27
      %s37 = scalar_select %p34, %s36, %s27
      %p38 = scmp.ge.s32.totalorder %s37, 2
      %s39 = scalar_select %p38, 0, %s37
      %s40 = ssub.s32 %s27, %s39
      %s41 = ssub.s32 %s28, %s35
      %s42 = sor.u32 %s40, %s41
      %p43 = scmp.eq.s32.totalorder %s42, 0
      %s45 = sadd.s32 %s44, 1
      %s46 = scalar_select %p43, %s44, %s45
      %p49 = pneg %p43
      %p50 = scmp.eq.s32.totalorder %s20, 1
      %p51 = por %p49, %p50
      %p52 = scmp.ne.s32.totalorder %s44, %s47
      %p53 = scmp.eq.s32.totalorder %s20, 0
      %p54 = por %p52, %p53
      %p55 = scmp.ne.s32.totalorder %s44, %s47
      %p56 = scmp.eq.s32.totalorder %s25, 1
      %p57 = por %p55, %p56
      %p58 = scmp.ne.s32.totalorder %s47, %s48
      %p59 = scmp.eq.s32.totalorder %s25, 0
      %p60 = por %p58, %p59
      %p61 = scmp.ne.s32.totalorder %s47, %s48
      %p62 = scmp.eq.s32.totalorder %s26, 1
      %p63 = por %p61, %p62
      %p65 = scmp.ne.s32.totalorder %s48, %s64
      %p66 = scmp.eq.s32.totalorder %s26, 0
      %p67 = por %p65, %p66
      %s69 = sadd.s32 %s68, 1
      %p72 = scmp.eq.s32.totalorder %s20, 1
      %p73 = scmp.ne.s32.totalorder %s68, %s70
      %p74 = scmp.eq.s32.totalorder %s20, 0
      %p75 = por %p73, %p74
      %p76 = scmp.ne.s32.totalorder %s68, %s70
      %p77 = scmp.eq.s32.totalorder %s25, 1
      %p78 = por %p76, %p77
      %p79 = scmp.ne.s32.totalorder %s70, %s71
      %p80 = scmp.eq.s32.totalorder %s25, 0
      %p81 = por %p79, %p80
      %p82 = scmp.ne.s32.totalorder %s70, %s71
      %p83 = scmp.eq.s32.totalorder %s26, 1
      %p84 = por %p82, %p83
      %p86 = scmp.ne.s32.totalorder %s71, %s85
      %p87 = scmp.eq.s32.totalorder %s26, 0
      %p88 = por %p86, %p87
      %s90 = sadd.s32 %s89, 1
      %p93 = scmp.eq.s32.totalorder %s20, 1
      %p94 = scmp.ne.s32.totalorder %s89, %s91
      %p95 = scmp.eq.s32.totalorder %s20, 0
      %p96 = por %p94, %p95
      %p97 = scmp.ne.s32.totalorder %s89, %s91
      %p98 = scmp.eq.s32.totalorder %s25, 1
      %p99 = por %p97, %p98
      %p100 = scmp.ne.s32.totalorder %s91, %s92
      %p101 = scmp.eq.s32.totalorder %s25, 0
      %p102 = por %p100, %p101
      %p103 = scmp.ne.s32.totalorder %s91, %s92
      %p104 = scmp.eq.s32.totalorder %s26, 1
      %p105 = por %p103, %p104
      %p107 = scmp.ne.s32.totalorder %s92, %s106
      %p108 = scmp.eq.s32.totalorder %s26, 0
      %p109 = por %p107, %p108
      %s110 = ssub.s32 %s27, %s39
      %s111 = ssub.s32 %s28, %s35
      %s112 = sor.u32 %s110, %s111
      %p113 = scmp.eq.s32.totalorder %s112, 0
      %s115 = sadd.s32 %s114, 1
      %s116 = scalar_select %p113, %s114, %s115
      %p119 = pneg %p113
      %p120 = scmp.eq.s32.totalorder %s20, 1
      %p121 = por %p119, %p120
      %p122 = scmp.ne.s32.totalorder %s114, %s117
      %p123 = scmp.eq.s32.totalorder %s20, 0
      %p124 = por %p122, %p123
      %p125 = scmp.ne.s32.totalorder %s114, %s117
      %p126 = scmp.eq.s32.totalorder %s25, 1
      %p127 = por %p125, %p126
      %p128 = scmp.ne.s32.totalorder %s117, %s118
      %p129 = scmp.eq.s32.totalorder %s25, 0
      %p130 = por %p128, %p129
      %p131 = scmp.ne.s32.totalorder %s117, %s118
      %p132 = scmp.eq.s32.totalorder %s26, 1
      %p133 = por %p131, %p132
      %p135 = scmp.ne.s32.totalorder %s118, %s134
      %p136 = scmp.eq.s32.totalorder %s26, 0
      %p137 = por %p135, %p136
      %s138 = ssub.s32 %s27, %s39
      %s139 = ssub.s32 %s28, %s35
      %s140 = sor.u32 %s138, %s139
      %p141 = scmp.eq.s32.totalorder %s140, 0
      %s143 = sadd.s32 %s142, 1
      %s144 = scalar_select %p141, %s142, %s143
      %p147 = pneg %p141
      %p148 = scmp.eq.s32.totalorder %s20, 1
      %p149 = por %p147, %p148
      %p150 = scmp.ne.s32.totalorder %s142, %s145
      %p151 = scmp.eq.s32.totalorder %s20, 0
      %p152 = por %p150, %p151
      %p153 = scmp.ne.s32.totalorder %s142, %s145
      %p154 = scmp.eq.s32.totalorder %s25, 1
      %p155 = por %p153, %p154
      %p156 = scmp.ne.s32.totalorder %s145, %s146
      %p157 = scmp.eq.s32.totalorder %s25, 0
      %p158 = por %p156, %p157
      %p159 = scmp.ne.s32.totalorder %s145, %s146
      %p160 = scmp.eq.s32.totalorder %s26, 1
      %p161 = por %p159, %p160
      %p163 = scmp.ne.s32.totalorder %s146, %s162
      %p164 = scmp.eq.s32.totalorder %s26, 0
      %p165 = por %p163, %p164
      %p166 = scmp.le.s32.totalorder 1, %s20
      %p167 = scmp.lt.s32.totalorder %s20, 3
      %p168 = pnand %p166, %p167
      %p169 = pneg %p168
      // Predicated region
      $region9: #{tpu_custom_call.1} parent=5 // pred_check
        _
      $region10: #{tpu_custom_call.1} parent=5 // pred_check_branch
        %171 = sbr.rel (%p168) target = $region12
      $region11: #{tpu_custom_call.1} parent=5 // pred_region
        %s172 = ssub.s32 %s20, 1
        // Predicated region
        $region13: #{tpu_custom_call.1} parent=11 // pred_check
          %p173 = pneg %p81
        $region14: #{tpu_custom_call.1} parent=11 // pred_check_branch
          %175 = sbr.rel (%p173) target = $region16
        $region15: #{tpu_custom_call.1} parent=11 // pred_region
          _
        $region16: #{tpu_custom_call.1} parent=11 // pred_fallthru
          _
        // Predicated region
        $region17: #{tpu_custom_call.1} parent=11 // pred_check
          %p176 = pneg %p102
        $region18: #{tpu_custom_call.1} parent=11 // pred_check_branch
          %178 = sbr.rel (%p176) target = $region20
        $region19: #{tpu_custom_call.1} parent=11 // pred_region
          _
        $region20: #{tpu_custom_call.1} parent=11 // pred_fallthru
          _
      $region12: #{tpu_custom_call.1} parent=5 // pred_fallthru
        _
      %p179 = scmp.lt.s32.totalorder %s20, 2
      // Predicated region
      $region21: #{tpu_custom_call.1} parent=5 // pred_check
        %p180 = pneg %p179
      $region22: #{tpu_custom_call.1} parent=5 // pred_check_branch
        %182 = sbr.rel (%p180) target = $region24
      $region23: #{tpu_custom_call.1} parent=5 // pred_region
        // Predicated region
        $region25: #{tpu_custom_call.1} parent=23 // pred_check
          %p183 = pneg %p54
        $region26: #{tpu_custom_call.1} parent=23 // pred_check_branch
          %185 = sbr.rel (%p183) target = $region28
        $region27: #{tpu_custom_call.1} parent=23 // pred_region
          %s186 = sand.u32 %s44, 1
          %s187 = scalar_lea.sflag [#allocation3], %s186
          %s188 = sand.u32 %s44, 1
          %s189 = smul.addr %s188, 128
          %s190 = scalar_lea.vmem [#allocation2], %s189
          %s191 = smul.u32 2, %s28
          %193 = vsyncadd %s187, 0
          %s194 = smul.addr %s27, 16
          %s195 = sadd.s32 %s191, %s194
          %s196 = smul.addr %s195, 8
          %s197 = scalar_lea.hbm %s0, %s196
          %s198 = sshll.u32 %s197, 4
          %s199 = int_to_ptr.hbm [resolvable:$true] %s198
          %s200 = sshll.u32 %s190, 4
          %s201 = int_to_ptr.vmem [resolvable:$true] %s200
          %206 = dma.hbm_to_vmem [thread:$0]  %s199, 2048, %s201, %s187, 256, 256, 16
        $region28: #{tpu_custom_call.1} parent=23 // pred_fallthru
          _
      $region24: #{tpu_custom_call.1} parent=5 // pred_fallthru
        _
      %p207 = scmp.le.s32.totalorder 1, %s20
      %p208 = scmp.lt.s32.totalorder %s20, 3
      %p209 = pnand %p207, %p208
      %p210 = pneg %p209
      // Predicated region
      $region29: #{tpu_custom_call.1} parent=5 // pred_check
        _
      $region30: #{tpu_custom_call.1} parent=5 // pred_check_branch
        %212 = sbr.rel (%p209) target = $region32
      $region31: #{tpu_custom_call.1} parent=5 // pred_region
        %s213 = ssub.s32 %s20, 1
        %s214 = sand.u32 %s47, 1
        %s215 = scalar_lea.sflag [#allocation3], %s214
        %s216 = sand.u32 %s47, 1
        %s217 = smul.addr %s216, 128
        %s218 = scalar_lea.vmem [#allocation2], %s217
        // Predicated region
        $region33: #{tpu_custom_call.1} parent=31 // pred_check
          %p219 = pneg %p60
        $region34: #{tpu_custom_call.1} parent=31 // pred_check_branch
          %221 = sbr.rel (%p219) target = $region36
        $region35: #{tpu_custom_call.1} parent=31 // pred_region
          %223 = dma.done %s215, 2048
        $region36: #{tpu_custom_call.1} parent=31 // pred_fallthru
          _
        %s224 = sand.u32 %s47, 1
        %s225 = scalar_lea.sflag [#allocation3], %s224
        %s226 = sand.u32 %s47, 1
        %s227 = smul.addr %s226, 128
        %s228 = scalar_lea.vmem [#allocation2], %s227
        %p229 = pneg %p60
        %p230 = pneg %p57
        %p231 = pneg %p81
        %p232 = pneg %p78
        %p233 = pneg %p102
        %p234 = pneg %p99
        %p235 = pneg %p130
        %p236 = pneg %p127
        %s237 = sand.u32 %s117, 1
        %s238 = scalar_lea.sflag [#allocation4], %s237
        %s239 = sand.u32 %s117, 1
        %s240 = smul.addr %s239, 128
        %s241 = scalar_lea.vmem [#allocation5], %s240
        %p242 = pneg %p158
        %p243 = pneg %p155
        %s244 = sand.u32 %s145, 1
        %s245 = scalar_lea.sflag [#allocation7], %s244
        %s246 = sand.u32 %s145, 1
        %s247 = smul.addr %s246, 2
        %s248 = scalar_lea.vmem [#allocation6], %s247
        %s249 = smul.u32 2, %s30
        %s250 = smul.u32 2, %s30
        %v251 = vld [vmem:[%s218] sm:$0xff]
        %v252 = vld [vmem:[%s218 + $0x8] sm:$0xff]
        %v253 = vld [vmem:[%s218 + $0x10] sm:$0xff]
        %v254 = vld [vmem:[%s218 + $0x18] sm:$0xff]
        %v255 = vld [vmem:[%s218 + $0x20] sm:$0xff]
        %v256 = vld [vmem:[%s218 + $0x28] sm:$0xff]
        %v257 = vld [vmem:[%s218 + $0x30] sm:$0xff]
        %v258 = vld [vmem:[%s218 + $0x38] sm:$0xff]
        %v259 = vld [vmem:[%s218 + $0x40] sm:$0xff]
        %v260 = vld [vmem:[%s218 + $0x48] sm:$0xff]
        %v261 = vld [vmem:[%s218 + $0x50] sm:$0xff]
        %v262 = vld [vmem:[%s218 + $0x58] sm:$0xff]
        %v263 = vld [vmem:[%s218 + $0x60] sm:$0xff]
        %v264 = vld [vmem:[%s218 + $0x68] sm:$0xff]
        %v265 = vld [vmem:[%s218 + $0x70] sm:$0xff]
        %v266 = vld [vmem:[%s218 + $0x78] sm:$0xff]
        %v267 = vld [vmem:[%s1] sm:$0xff]
        %v268 = vld [vmem:[%s1 + $0x8] sm:$0xff]
        %v269 = vld [vmem:[%s1 + $0x10] sm:$0xff]
        %v270 = vld [vmem:[%s1 + $0x18] sm:$0xff]
        %v271 = vld [vmem:[%s1 + $0x20] sm:$0xff]
        %v272 = vld [vmem:[%s1 + $0x28] sm:$0xff]
        %v273 = vld [vmem:[%s1 + $0x30] sm:$0xff]
        %v274 = vld [vmem:[%s1 + $0x38] sm:$0xff]
        %v275 = vld [vmem:[%s1 + $0x40] sm:$0xff]
        %v276 = vld [vmem:[%s1 + $0x48] sm:$0xff]
        %v277 = vld [vmem:[%s1 + $0x50] sm:$0xff]
        %v278 = vld [vmem:[%s1 + $0x58] sm:$0xff]
        %v279 = vld [vmem:[%s1 + $0x60] sm:$0xff]
        %v280 = vld [vmem:[%s1 + $0x68] sm:$0xff]
        %v281 = vld [vmem:[%s1 + $0x70] sm:$0xff]
        %v282 = vld [vmem:[%s1 + $0x78] sm:$0xff]
        %v283 = vld [vmem:[%s2] sm:$0xff]
        %v284 = vld [vmem:[%s2 + $0x8] sm:$0xff]
        %v285 = vld [vmem:[%s2 + $0x10] sm:$0xff]
        %v286 = vld [vmem:[%s2 + $0x18] sm:$0xff]
        %v287 = vld [vmem:[%s2 + $0x20] sm:$0xff]
        %v288 = vld [vmem:[%s2 + $0x28] sm:$0xff]
        %v289 = vld [vmem:[%s2 + $0x30] sm:$0xff]
        %v290 = vld [vmem:[%s2 + $0x38] sm:$0xff]
        %v291 = vlaneseq
        %v292 = vshrl.u32 %v291, 7
        %vm293 = vcmp.eq.s32.totalorder %v292, 0
        %v294 = vsel %vm293, 1, 0
        %v295 = vcvt.s32.f32 %v294
        %vm296 = vcmask 588800
        %v298 = vsel %vm296, %v267, 0
        %v301 = vsel %vm296, %v268, 0
        %v304 = vsel %vm296, %v269, 0
        %v307 = vsel %vm296, %v270, 0
        %v310 = vsel %vm296, %v271, 0
        %v313 = vsel %vm296, %v272, 0
        %v316 = vsel %vm296, %v273, 0
        %v319 = vsel %vm296, %v274, 0
        %v322 = vsel %vm296, %v275, 0
        %v325 = vsel %vm296, %v276, 0
        %v328 = vsel %vm296, %v277, 0
        %v331 = vsel %vm296, %v278, 0
        %v334 = vsel %vm296, %v279, 0
        %v337 = vsel %vm296, %v280, 0
        %v340 = vsel %vm296, %v281, 0
        %v343 = vsel %vm296, %v282, 0
        %345 = vmatpush.msra.mxu0 0.0
        %346 = vmatpush.msra.mxu0 0.0
        %347 = vmatpush.msra.mxu0 0.0
        %348 = vmatpush.msra.mxu0 0.0
        %349 = vmatpush.msra.mxu0 0.0
        %350 = vmatpush.msra.mxu0 0.0
        %351 = vmatpush.msra.mxu0 0.0
        %352 = vmatpush.msra.mxu0 %v295
        %353 = vmatpush.msra.mxu0 %v265
        %354 = vmatpush.msra.mxu0 %v263
        %355 = vmatpush.msra.mxu0 %v261
        %356 = vmatpush.msra.mxu0 %v259
        %357 = vmatpush.msra.mxu0 %v257
        %358 = vmatpush.msra.mxu0 %v255
        %359 = vmatpush.msra.mxu0 %v253
        %360 = vmatpush.msra.mxu0 %v251
        %361 = vmatmul.f32.gmra.mxu0 %v298
        %v362 = vpop.f32.mrf.mxu0
        %v363 = vadd.f32 0.0, %v362
        %364 = vmatmul.f32.gmra.mxu0 %v301
        %v365 = vpop.f32.mrf.mxu0
        %v366 = vadd.f32 0.0, %v365
        %367 = vmatmul.f32.gmra.mxu0 %v304
        %v368 = vpop.f32.mrf.mxu0
        %v369 = vadd.f32 0.0, %v368
        %370 = vmatmul.f32.gmra.mxu0 %v307
        %v371 = vpop.f32.mrf.mxu0
        %v372 = vadd.f32 0.0, %v371
        %373 = vmatmul.f32.gmra.mxu0 %v310
        %v374 = vpop.f32.mrf.mxu0
        %v375 = vadd.f32 0.0, %v374
        %376 = vmatmul.f32.gmra.mxu0 %v313
        %v377 = vpop.f32.mrf.mxu0
        %v378 = vadd.f32 0.0, %v377
        %379 = vmatmul.f32.gmra.mxu0 %v316
        %v380 = vpop.f32.mrf.mxu0
        %v381 = vadd.f32 0.0, %v380
        %382 = vmatmul.f32.gmra.mxu0 %v319
        %v383 = vpop.f32.mrf.mxu0
        %v384 = vadd.f32 0.0, %v383
        %385 = vmatmul.f32.gmra.mxu0 %v322
        %v386 = vpop.f32.mrf.mxu0
        %v387 = vadd.f32 0.0, %v386
        %388 = vmatmul.f32.gmra.mxu0 %v325
        %v389 = vpop.f32.mrf.mxu0
        %v390 = vadd.f32 0.0, %v389
        %391 = vmatmul.f32.gmra.mxu0 %v328
        %v392 = vpop.f32.mrf.mxu0
        %v393 = vadd.f32 0.0, %v392
        %394 = vmatmul.f32.gmra.mxu0 %v331
        %v395 = vpop.f32.mrf.mxu0
        %v396 = vadd.f32 0.0, %v395
        %397 = vmatmul.f32.gmra.mxu0 %v334
        %v398 = vpop.f32.mrf.mxu0
        %v399 = vadd.f32 0.0, %v398
        %400 = vmatmul.f32.gmra.mxu0 %v337
        %v401 = vpop.f32.mrf.mxu0
        %v402 = vadd.f32 0.0, %v401
        %403 = vmatmul.f32.gmra.mxu0 %v340
        %v404 = vpop.f32.mrf.mxu0
        %v405 = vadd.f32 0.0, %v404
        %406 = vmatmul.f32.gmra.mxu0 %v343
        %v407 = vpop.f32.mrf.mxu0
        %v408 = vadd.f32 0.0, %v407
        %409 = vdwg.mxu0
        %410 = vmatpush.msra.mxu0 0.0
        %411 = vmatpush.msra.mxu0 0.0
        %412 = vmatpush.msra.mxu0 0.0
        %413 = vmatpush.msra.mxu0 0.0
        %414 = vmatpush.msra.mxu0 0.0
        %415 = vmatpush.msra.mxu0 0.0
        %416 = vmatpush.msra.mxu0 0.0
        %417 = vmatpush.msra.mxu0 %v295
        %418 = vmatpush.msra.mxu0 %v266
        %419 = vmatpush.msra.mxu0 %v264
        %420 = vmatpush.msra.mxu0 %v262
        %421 = vmatpush.msra.mxu0 %v260
        %422 = vmatpush.msra.mxu0 %v258
        %423 = vmatpush.msra.mxu0 %v256
        %424 = vmatpush.msra.mxu0 %v254
        %425 = vmatpush.msra.mxu0 %v252
        %426 = vmatmul.f32.gmra.mxu0 %v298
        %v427 = vpop.f32.mrf.mxu0
        %v428 = vadd.f32 0.0, %v427
        %429 = vmatmul.f32.gmra.mxu0 %v301
        %v430 = vpop.f32.mrf.mxu0
        %v431 = vadd.f32 0.0, %v430
        %432 = vmatmul.f32.gmra.mxu0 %v304
        %v433 = vpop.f32.mrf.mxu0
        %v434 = vadd.f32 0.0, %v433
        %435 = vmatmul.f32.gmra.mxu0 %v307
        %v436 = vpop.f32.mrf.mxu0
        %v437 = vadd.f32 0.0, %v436
        %438 = vmatmul.f32.gmra.mxu0 %v310
        %v439 = vpop.f32.mrf.mxu0
        %v440 = vadd.f32 0.0, %v439
        %441 = vmatmul.f32.gmra.mxu0 %v313
        %v442 = vpop.f32.mrf.mxu0
        %v443 = vadd.f32 0.0, %v442
        %444 = vmatmul.f32.gmra.mxu0 %v316
        %v445 = vpop.f32.mrf.mxu0
        %v446 = vadd.f32 0.0, %v445
        %447 = vmatmul.f32.gmra.mxu0 %v319
        %v448 = vpop.f32.mrf.mxu0
        %v449 = vadd.f32 0.0, %v448
        %450 = vmatmul.f32.gmra.mxu0 %v322
        %v451 = vpop.f32.mrf.mxu0
        %v452 = vadd.f32 0.0, %v451
        %453 = vmatmul.f32.gmra.mxu0 %v325
        %v454 = vpop.f32.mrf.mxu0
        %v455 = vadd.f32 0.0, %v454
        %456 = vmatmul.f32.gmra.mxu0 %v328
        %v457 = vpop.f32.mrf.mxu0
        %v458 = vadd.f32 0.0, %v457
        %459 = vmatmul.f32.gmra.mxu0 %v331
        %v460 = vpop.f32.mrf.mxu0
        %v461 = vadd.f32 0.0, %v460
        %462 = vmatmul.f32.gmra.mxu0 %v334
        %v463 = vpop.f32.mrf.mxu0
        %v464 = vadd.f32 0.0, %v463
        %465 = vmatmul.f32.gmra.mxu0 %v337
        %v466 = vpop.f32.mrf.mxu0
        %v467 = vadd.f32 0.0, %v466
        %468 = vmatmul.f32.gmra.mxu0 %v340
        %v469 = vpop.f32.mrf.mxu0
        %v470 = vadd.f32 0.0, %v469
        %471 = vmatmul.f32.gmra.mxu0 %v343
        %v472 = vpop.f32.mrf.mxu0
        %v473 = vadd.f32 0.0, %v472
        %474 = vdwg.mxu0
        %v475 = vmax.f32 %v363, %v369
        %v476 = vmax.f32 %v366, %v372
        %v477 = vmax.f32 %v475, %v375
        %v478 = vmax.f32 %v476, %v378
        %v479 = vmax.f32 %v477, %v381
        %v480 = vmax.f32 %v478, %v384
        %v481 = vmax.f32 %v479, %v387
        %v482 = vmax.f32 %v480, %v390
        %v483 = vmax.f32 %v481, %v393
        %v484 = vmax.f32 %v482, %v396
        %v485 = vmax.f32 %v483, %v399
        %v486 = vmax.f32 %v484, %v402
        %v487 = vmax.f32 %v485, %v405
        %v488 = vmax.f32 %v486, %v408
        %v489 = vmax.f32 %v487, %v488
        %v490 = vrot.slane %v489, 4
        %v491 = vmax.f32 %v489, %v490
        %v492 = vrot.slane %v491, 2
        %v493 = vmax.f32 %v491, %v492
        %v494 = vrot.slane %v493, 1
        %v495 = vmax.f32 %v493, %v494
        %v496 = vmax.f32 %v428, %v434
        %v497 = vmax.f32 %v431, %v437
        %v498 = vmax.f32 %v496, %v440
        %v499 = vmax.f32 %v497, %v443
        %v500 = vmax.f32 %v498, %v446
        %v501 = vmax.f32 %v499, %v449
        %v502 = vmax.f32 %v500, %v452
        %v503 = vmax.f32 %v501, %v455
        %v504 = vmax.f32 %v502, %v458
        %v505 = vmax.f32 %v503, %v461
        %v506 = vmax.f32 %v504, %v464
        %v507 = vmax.f32 %v505, %v467
        %v508 = vmax.f32 %v506, %v470
        %v509 = vmax.f32 %v507, %v473
        %v510 = vmax.f32 %v508, %v509
        %v511 = vrot.slane %v510, 4
        %v512 = vmax.f32 %v510, %v511
        %v513 = vrot.slane %v512, 2
        %v514 = vmax.f32 %v512, %v513
        %v515 = vrot.slane %v514, 1
        %v516 = vmax.f32 %v514, %v515
        %v517 = vadd.s32 %v292, 8
        %v518 = vadd.s32 %v292, 16
        %v519 = vadd.s32 %v292, 24
        %v520 = vadd.s32 %v292, 32
        %v521 = vadd.s32 %v292, 40
        %v522 = vadd.s32 %v292, 48
        %v523 = vadd.s32 %v292, 56
        %v524 = vadd.s32 %v292, 64
        %v525 = vadd.s32 %v292, 72
        %v526 = vadd.s32 %v292, 80
        %v527 = vadd.s32 %v292, 88
        %v528 = vadd.s32 %v292, 96
        %v529 = vadd.s32 %v292, 104
        %v530 = vadd.s32 %v292, 112
        %v531 = vadd.s32 %v292, 120
        %vm532 = vcmp.ge.f32.partialorder %v363, %v495
        %vm533 = vcmp.ge.f32.partialorder %v428, %v516
        %vm534 = vcmp.ge.f32.partialorder %v366, %v495
        %vm535 = vcmp.ge.f32.partialorder %v431, %v516
        %vm536 = vcmp.ge.f32.partialorder %v369, %v495
        %vm537 = vcmp.ge.f32.partialorder %v434, %v516
        %vm538 = vcmp.ge.f32.partialorder %v372, %v495
        %vm539 = vcmp.ge.f32.partialorder %v437, %v516
        %vm540 = vcmp.ge.f32.partialorder %v375, %v495
        %vm541 = vcmp.ge.f32.partialorder %v440, %v516
        %vm542 = vcmp.ge.f32.partialorder %v378, %v495
        %vm543 = vcmp.ge.f32.partialorder %v443, %v516
        %vm544 = vcmp.ge.f32.partialorder %v381, %v495
        %vm545 = vcmp.ge.f32.partialorder %v446, %v516
        %vm546 = vcmp.ge.f32.partialorder %v384, %v495
        %vm547 = vcmp.ge.f32.partialorder %v449, %v516
        %vm548 = vcmp.ge.f32.partialorder %v387, %v495
        %vm549 = vcmp.ge.f32.partialorder %v452, %v516
        %vm550 = vcmp.ge.f32.partialorder %v390, %v495
        %vm551 = vcmp.ge.f32.partialorder %v455, %v516
        %vm552 = vcmp.ge.f32.partialorder %v393, %v495
        %vm553 = vcmp.ge.f32.partialorder %v458, %v516
        %vm554 = vcmp.ge.f32.partialorder %v396, %v495
        %vm555 = vcmp.ge.f32.partialorder %v461, %v516
        %vm556 = vcmp.ge.f32.partialorder %v399, %v495
        %vm557 = vcmp.ge.f32.partialorder %v464, %v516
        %vm558 = vcmp.ge.f32.partialorder %v402, %v495
        %vm559 = vcmp.ge.f32.partialorder %v467, %v516
        %vm560 = vcmp.ge.f32.partialorder %v405, %v495
        %vm561 = vcmp.ge.f32.partialorder %v470, %v516
        %vm562 = vcmp.ge.f32.partialorder %v408, %v495
        %vm563 = vcmp.ge.f32.partialorder %v473, %v516
        %v564 = vsel %vm532, %v292, 128
        %v565 = vsel %vm533, %v292, 128
        %v566 = vsel %vm534, %v517, 128
        %v567 = vsel %vm535, %v517, 128
        %v568 = vsel %vm536, %v518, 128
        %v569 = vsel %vm537, %v518, 128
        %v570 = vsel %vm538, %v519, 128
        %v571 = vsel %vm539, %v519, 128
        %v572 = vsel %vm540, %v520, 128
        %v573 = vsel %vm541, %v520, 128
        %v574 = vsel %vm542, %v521, 128
        %v575 = vsel %vm543, %v521, 128
        %v576 = vsel %vm544, %v522, 128
        %v577 = vsel %vm545, %v522, 128
        %v578 = vsel %vm546, %v523, 128
        %v579 = vsel %vm547, %v523, 128
        %v580 = vsel %vm548, %v524, 128
        %v581 = vsel %vm549, %v524, 128
        %v582 = vsel %vm550, %v525, 128
        %v583 = vsel %vm551, %v525, 128
        %v584 = vsel %vm552, %v526, 128
        %v585 = vsel %vm553, %v526, 128
        %v586 = vsel %vm554, %v527, 128
        %v587 = vsel %vm555, %v527, 128
        %v588 = vsel %vm556, %v528, 128
        %v589 = vsel %vm557, %v528, 128
        %v590 = vsel %vm558, %v529, 128
        %v591 = vsel %vm559, %v529, 128
        %v592 = vsel %vm560, %v530, 128
        %v593 = vsel %vm561, %v530, 128
        %v594 = vsel %vm562, %v531, 128
        %v595 = vsel %vm563, %v531, 128
        %vm596 = vcmp.lt.s32.totalorder %v564, %v568
        %v597 = vsel %vm596, %v564, %v568
        %vm598 = vcmp.lt.s32.totalorder %v566, %v570
        %v599 = vsel %vm598, %v566, %v570
        %vm600 = vcmp.lt.s32.totalorder %v597, %v572
        %v601 = vsel %vm600, %v597, %v572
        %vm602 = vcmp.lt.s32.totalorder %v599, %v574
        %v603 = vsel %vm602, %v599, %v574
        %vm604 = vcmp.lt.s32.totalorder %v601, %v576
        %v605 = vsel %vm604, %v601, %v576
        %vm606 = vcmp.lt.s32.totalorder %v603, %v578
        %v607 = vsel %vm606, %v603, %v578
        %vm608 = vcmp.lt.s32.totalorder %v605, %v580
        %v609 = vsel %vm608, %v605, %v580
        %vm610 = vcmp.lt.s32.totalorder %v607, %v582
        %v611 = vsel %vm610, %v607, %v582
        %vm612 = vcmp.lt.s32.totalorder %v609, %v584
        %v613 = vsel %vm612, %v609, %v584
        %vm614 = vcmp.lt.s32.totalorder %v611, %v586
        %v615 = vsel %vm614, %v611, %v586
        %vm616 = vcmp.lt.s32.totalorder %v613, %v588
        %v617 = vsel %vm616, %v613, %v588
        %vm618 = vcmp.lt.s32.totalorder %v615, %v590
        %v619 = vsel %vm618, %v615, %v590
        %vm620 = vcmp.lt.s32.totalorder %v617, %v592
        %v621 = vsel %vm620, %v617, %v592
        %vm622 = vcmp.lt.s32.totalorder %v619, %v594
        %v623 = vsel %vm622, %v619, %v594
        %vm624 = vcmp.lt.s32.totalorder %v621, %v623
        %v625 = vsel %vm624, %v621, %v623
        %v626 = vrot.slane %v625, 4
        %vm627 = vcmp.lt.s32.totalorder %v625, %v626
        %v628 = vsel %vm627, %v625, %v626
        %v629 = vrot.slane %v628, 2
        %vm630 = vcmp.lt.s32.totalorder %v628, %v629
        %v631 = vsel %vm630, %v628, %v629
        %v632 = vrot.slane %v631, 1
        %vm633 = vcmp.lt.s32.totalorder %v631, %v632
        %v634 = vsel %vm633, %v631, %v632
        %vm635 = vcmp.lt.s32.totalorder %v565, %v569
        %v636 = vsel %vm635, %v565, %v569
        %vm637 = vcmp.lt.s32.totalorder %v567, %v571
        %v638 = vsel %vm637, %v567, %v571
        %vm639 = vcmp.lt.s32.totalorder %v636, %v573
        %v640 = vsel %vm639, %v636, %v573
        %vm641 = vcmp.lt.s32.totalorder %v638, %v575
        %v642 = vsel %vm641, %v638, %v575
        %vm643 = vcmp.lt.s32.totalorder %v640, %v577
        %v644 = vsel %vm643, %v640, %v577
        %vm645 = vcmp.lt.s32.totalorder %v642, %v579
        %v646 = vsel %vm645, %v642, %v579
        %vm647 = vcmp.lt.s32.totalorder %v644, %v581
        %v648 = vsel %vm647, %v644, %v581
        %vm649 = vcmp.lt.s32.totalorder %v646, %v583
        %v650 = vsel %vm649, %v646, %v583
        %vm651 = vcmp.lt.s32.totalorder %v648, %v585
        %v652 = vsel %vm651, %v648, %v585
        %vm653 = vcmp.lt.s32.totalorder %v650, %v587
        %v654 = vsel %vm653, %v650, %v587
        %vm655 = vcmp.lt.s32.totalorder %v652, %v589
        %v656 = vsel %vm655, %v652, %v589
        %vm657 = vcmp.lt.s32.totalorder %v654, %v591
        %v658 = vsel %vm657, %v654, %v591
        %vm659 = vcmp.lt.s32.totalorder %v656, %v593
        %v660 = vsel %vm659, %v656, %v593
        %vm661 = vcmp.lt.s32.totalorder %v658, %v595
        %v662 = vsel %vm661, %v658, %v595
        %vm663 = vcmp.lt.s32.totalorder %v660, %v662
        %v664 = vsel %vm663, %v660, %v662
        %v665 = vrot.slane %v664, 4
        %vm666 = vcmp.lt.s32.totalorder %v664, %v665
        %v667 = vsel %vm666, %v664, %v665
        %v668 = vrot.slane %v667, 2
        %vm669 = vcmp.lt.s32.totalorder %v667, %v668
        %v670 = vsel %vm669, %v667, %v668
        %v671 = vrot.slane %v670, 1
        %vm672 = vcmp.lt.s32.totalorder %v670, %v671
        %v673 = vsel %vm672, %v670, %v671
        %vm674 = vcmp.eq.s32.totalorder %v292, %v634
        %vm675 = vcmp.eq.s32.totalorder %v292, %v673
        %vm676 = vcmp.eq.s32.totalorder %v517, %v634
        %vm677 = vcmp.eq.s32.totalorder %v517, %v673
        %vm678 = vcmp.eq.s32.totalorder %v518, %v634
        %vm679 = vcmp.eq.s32.totalorder %v518, %v673
        %vm680 = vcmp.eq.s32.totalorder %v519, %v634
        %vm681 = vcmp.eq.s32.totalorder %v519, %v673
        %vm682 = vcmp.eq.s32.totalorder %v520, %v634
        %vm683 = vcmp.eq.s32.totalorder %v520, %v673
        %vm684 = vcmp.eq.s32.totalorder %v521, %v634
        %vm685 = vcmp.eq.s32.totalorder %v521, %v673
        %vm686 = vcmp.eq.s32.totalorder %v522, %v634
        %vm687 = vcmp.eq.s32.totalorder %v522, %v673
        %vm688 = vcmp.eq.s32.totalorder %v523, %v634
        %vm689 = vcmp.eq.s32.totalorder %v523, %v673
        %vm690 = vcmp.eq.s32.totalorder %v524, %v634
        %vm691 = vcmp.eq.s32.totalorder %v524, %v673
        %vm692 = vcmp.eq.s32.totalorder %v525, %v634
        %vm693 = vcmp.eq.s32.totalorder %v525, %v673
        %vm694 = vcmp.eq.s32.totalorder %v526, %v634
        %vm695 = vcmp.eq.s32.totalorder %v526, %v673
        %vm696 = vcmp.eq.s32.totalorder %v527, %v634
        %vm697 = vcmp.eq.s32.totalorder %v527, %v673
        %vm698 = vcmp.eq.s32.totalorder %v528, %v634
        %vm699 = vcmp.eq.s32.totalorder %v528, %v673
        %vm700 = vcmp.eq.s32.totalorder %v529, %v634
        %vm701 = vcmp.eq.s32.totalorder %v529, %v673
        %vm702 = vcmp.eq.s32.totalorder %v530, %v634
        %vm703 = vcmp.eq.s32.totalorder %v530, %v673
        %vm704 = vcmp.eq.s32.totalorder %v531, %v634
        %vm705 = vcmp.eq.s32.totalorder %v531, %v673
        %v706 = vsel %vm674, 1, 0
        %v707 = vsel %vm675, 1, 0
        %v708 = vsel %vm676, 1, 0
        %v709 = vsel %vm677, 1, 0
        %v710 = vsel %vm678, 1, 0
        %v711 = vsel %vm679, 1, 0
        %v712 = vsel %vm680, 1, 0
        %v713 = vsel %vm681, 1, 0
        %v714 = vsel %vm682, 1, 0
        %v715 = vsel %vm683, 1, 0
        %v716 = vsel %vm684, 1, 0
        %v717 = vsel %vm685, 1, 0
        %v718 = vsel %vm686, 1, 0
        %v719 = vsel %vm687, 1, 0
        %v720 = vsel %vm688, 1, 0
        %v721 = vsel %vm689, 1, 0
        %v722 = vsel %vm690, 1, 0
        %v723 = vsel %vm691, 1, 0
        %v724 = vsel %vm692, 1, 0
        %v725 = vsel %vm693, 1, 0
        %v726 = vsel %vm694, 1, 0
        %v727 = vsel %vm695, 1, 0
        %v728 = vsel %vm696, 1, 0
        %v729 = vsel %vm697, 1, 0
        %v730 = vsel %vm698, 1, 0
        %v731 = vsel %vm699, 1, 0
        %v732 = vsel %vm700, 1, 0
        %v733 = vsel %vm701, 1, 0
        %v734 = vsel %vm702, 1, 0
        %v735 = vsel %vm703, 1, 0
        %v736 = vsel %vm704, 1, 0
        %v737 = vsel %vm705, 1, 0
        %v738 = vcvt.s32.f32 %v706
        %v739 = vcvt.s32.f32 %v707
        %v740 = vcvt.s32.f32 %v708
        %v741 = vcvt.s32.f32 %v709
        %v742 = vcvt.s32.f32 %v710
        %v743 = vcvt.s32.f32 %v711
        %v744 = vcvt.s32.f32 %v712
        %v745 = vcvt.s32.f32 %v713
        %v746 = vcvt.s32.f32 %v714
        %v747 = vcvt.s32.f32 %v715
        %v748 = vcvt.s32.f32 %v716
        %v749 = vcvt.s32.f32 %v717
        %v750 = vcvt.s32.f32 %v718
        %v751 = vcvt.s32.f32 %v719
        %v752 = vcvt.s32.f32 %v720
        %v753 = vcvt.s32.f32 %v721
        %v754 = vcvt.s32.f32 %v722
        %v755 = vcvt.s32.f32 %v723
        %v756 = vcvt.s32.f32 %v724
        %v757 = vcvt.s32.f32 %v725
        %v758 = vcvt.s32.f32 %v726
        %v759 = vcvt.s32.f32 %v727
        %v760 = vcvt.s32.f32 %v728
        %v761 = vcvt.s32.f32 %v729
        %v762 = vcvt.s32.f32 %v730
        %v763 = vcvt.s32.f32 %v731
        %v764 = vcvt.s32.f32 %v732
        %v765 = vcvt.s32.f32 %v733
        %v766 = vcvt.s32.f32 %v734
        %v767 = vcvt.s32.f32 %v735
        %v768 = vcvt.s32.f32 %v736
        %v769 = vcvt.s32.f32 %v737
        %770 = vmatpush.msra.mxu0 %v768
        %771 = vmatpush.msra.mxu0 %v766
        %772 = vmatpush.msra.mxu0 %v764
        %773 = vmatpush.msra.mxu0 %v762
        %774 = vmatpush.msra.mxu0 %v760
        %775 = vmatpush.msra.mxu0 %v758
        %776 = vmatpush.msra.mxu0 %v756
        %777 = vmatpush.msra.mxu0 %v754
        %778 = vmatpush.msra.mxu0 %v752
        %779 = vmatpush.msra.mxu0 %v750
        %780 = vmatpush.msra.mxu0 %v748
        %781 = vmatpush.msra.mxu0 %v746
        %782 = vmatpush.msra.mxu0 %v744
        %783 = vmatpush.msra.mxu0 %v742
        %784 = vmatpush.msra.mxu0 %v740
        %785 = vmatpush.msra.mxu0 %v738
        %786 = vmatmul.f32.gmra.mxu0 %v283
        %v787 = vpop.f32.mrf.mxu0
        %v788 = vadd.f32 0.0, %v787
        %789 = vmatmul.f32.gmra.mxu0 %v284
        %v790 = vpop.f32.mrf.mxu0
        %v791 = vadd.f32 0.0, %v790
        %792 = vmatmul.f32.gmra.mxu0 %v285
        %v793 = vpop.f32.mrf.mxu0
        %v794 = vadd.f32 0.0, %v793
        %795 = vmatmul.f32.gmra.mxu0 %v286
        %v796 = vpop.f32.mrf.mxu0
        %v797 = vadd.f32 0.0, %v796
        %798 = vmatmul.f32.gmra.mxu0 %v287
        %v799 = vpop.f32.mrf.mxu0
        %v800 = vadd.f32 0.0, %v799
        %801 = vmatmul.f32.gmra.mxu0 %v288
        %v802 = vpop.f32.mrf.mxu0
        %v803 = vadd.f32 0.0, %v802
        %804 = vmatmul.f32.gmra.mxu0 %v289
        %v805 = vpop.f32.mrf.mxu0
        %v806 = vadd.f32 0.0, %v805
        %807 = vmatmul.f32.gmra.mxu0 %v290
        %v808 = vpop.f32.mrf.mxu0
        %v809 = vadd.f32 0.0, %v808
        %810 = vdwg.mxu0
        %811 = vmatpush.msra.mxu0 %v769
        %812 = vmatpush.msra.mxu0 %v767
        %813 = vmatpush.msra.mxu0 %v765
        %814 = vmatpush.msra.mxu0 %v763
        %815 = vmatpush.msra.mxu0 %v761
        %816 = vmatpush.msra.mxu0 %v759
        %817 = vmatpush.msra.mxu0 %v757
        %818 = vmatpush.msra.mxu0 %v755
        %819 = vmatpush.msra.mxu0 %v753
        %820 = vmatpush.msra.mxu0 %v751
        %821 = vmatpush.msra.mxu0 %v749
        %822 = vmatpush.msra.mxu0 %v747
        %823 = vmatpush.msra.mxu0 %v745
        %824 = vmatpush.msra.mxu0 %v743
        %825 = vmatpush.msra.mxu0 %v741
        %826 = vmatpush.msra.mxu0 %v739
        %827 = vmatmul.f32.gmra.mxu0 %v283
        %v828 = vpop.f32.mrf.mxu0
        %v829 = vadd.f32 0.0, %v828
        %830 = vmatmul.f32.gmra.mxu0 %v284
        %v831 = vpop.f32.mrf.mxu0
        %v832 = vadd.f32 0.0, %v831
        %833 = vmatmul.f32.gmra.mxu0 %v285
        %v834 = vpop.f32.mrf.mxu0
        %v835 = vadd.f32 0.0, %v834
        %836 = vmatmul.f32.gmra.mxu0 %v286
        %v837 = vpop.f32.mrf.mxu0
        %v838 = vadd.f32 0.0, %v837
        %839 = vmatmul.f32.gmra.mxu0 %v287
        %v840 = vpop.f32.mrf.mxu0
        %v841 = vadd.f32 0.0, %v840
        %842 = vmatmul.f32.gmra.mxu0 %v288
        %v843 = vpop.f32.mrf.mxu0
        %v844 = vadd.f32 0.0, %v843
        %845 = vmatmul.f32.gmra.mxu0 %v289
        %v846 = vpop.f32.mrf.mxu0
        %v847 = vadd.f32 0.0, %v846
        %848 = vmatmul.f32.gmra.mxu0 %v290
        %v849 = vpop.f32.mrf.mxu0
        %v850 = vadd.f32 0.0, %v849
        %851 = vdwg.mxu0
        %852 = vst [vmem:[%s241] sm:$0xff] %v788
        %853 = vst [vmem:[%s241 + $0x8] sm:$0xff] %v829
        %854 = vst [vmem:[%s241 + $0x10] sm:$0xff] %v791
        %855 = vst [vmem:[%s241 + $0x18] sm:$0xff] %v832
        %856 = vst [vmem:[%s241 + $0x20] sm:$0xff] %v794
        %857 = vst [vmem:[%s241 + $0x28] sm:$0xff] %v835
        %858 = vst [vmem:[%s241 + $0x30] sm:$0xff] %v797
        %859 = vst [vmem:[%s241 + $0x38] sm:$0xff] %v838
        %860 = vst [vmem:[%s241 + $0x40] sm:$0xff] %v800
        %861 = vst [vmem:[%s241 + $0x48] sm:$0xff] %v841
        %862 = vst [vmem:[%s241 + $0x50] sm:$0xff] %v803
        %863 = vst [vmem:[%s241 + $0x58] sm:$0xff] %v844
        %864 = vst [vmem:[%s241 + $0x60] sm:$0xff] %v806
        %865 = vst [vmem:[%s241 + $0x68] sm:$0xff] %v847
        %866 = vst [vmem:[%s241 + $0x70] sm:$0xff] %v809
        %867 = vst [vmem:[%s241 + $0x78] sm:$0xff] %v850
        %v868 = vsub.f32 %v788, %v251
        %v869 = vsub.f32 %v829, %v252
        %v870 = vsub.f32 %v791, %v253
        %v871 = vsub.f32 %v832, %v254
        %v872 = vsub.f32 %v794, %v255
        %v873 = vsub.f32 %v835, %v256
        %v874 = vsub.f32 %v797, %v257
        %v875 = vsub.f32 %v838, %v258
        %v876 = vsub.f32 %v800, %v259
        %v877 = vsub.f32 %v841, %v260
        %v878 = vsub.f32 %v803, %v261
        %v879 = vsub.f32 %v844, %v262
        %v880 = vsub.f32 %v806, %v263
        %v881 = vsub.f32 %v847, %v264
        %v882 = vsub.f32 %v809, %v265
        %v883 = vsub.f32 %v850, %v266
        %v884 = vmul.f32 %v868, %v868
        %v885 = vmul.f32 %v869, %v869
        %v886 = vmul.f32 %v870, %v870
        %v887 = vmul.f32 %v871, %v871
        %v888 = vmul.f32 %v872, %v872
        %v889 = vmul.f32 %v873, %v873
        %v890 = vmul.f32 %v874, %v874
        %v891 = vmul.f32 %v875, %v875
        %v892 = vmul.f32 %v876, %v876
        %v893 = vmul.f32 %v877, %v877
        %v894 = vmul.f32 %v878, %v878
        %v895 = vmul.f32 %v879, %v879
        %v896 = vmul.f32 %v880, %v880
        %v897 = vmul.f32 %v881, %v881
        %v898 = vmul.f32 %v882, %v882
        %v899 = vmul.f32 %v883, %v883
        %v900 = vadd.f32 %v884, %v886
        %v901 = vadd.f32 %v900, %v888
        %v902 = vadd.f32 %v901, %v890
        %v903 = vadd.f32 %v902, %v892
        %v904 = vadd.f32 %v903, %v894
        %v905 = vadd.f32 %v904, %v896
        %v906 = vadd.f32 %v905, %v898
        %v907 = vrot.slane %v906, 4
        %v908 = vadd.f32 %v906, %v907
        %v909 = vrot.slane %v908, 2
        %v910 = vadd.f32 %v908, %v909
        %v911 = vrot.slane %v910, 1
        %v912 = vadd.f32 %v910, %v911
        %v913 = vadd.f32 %v885, %v887
        %v914 = vadd.f32 %v913, %v889
        %v915 = vadd.f32 %v914, %v891
        %v916 = vadd.f32 %v915, %v893
        %v917 = vadd.f32 %v916, %v895
        %v918 = vadd.f32 %v917, %v897
        %v919 = vadd.f32 %v918, %v899
        %v920 = vrot.slane %v919, 4
        %v921 = vadd.f32 %v919, %v920
        %v922 = vrot.slane %v921, 2
        %v923 = vadd.f32 %v921, %v922
        %v924 = vrot.slane %v923, 1
        %v925 = vadd.f32 %v923, %v924
        %v928 = vrot.slane %v925, 7
        %vm929 = vcmask 1040384
        %v930 = vsel %vm929, %v912, %v928
        %v932 = vlaneseq
        %vm933 = vcmp.ge.s32.totalorder %v932, 0
        %vm934 = vcmp.lt.s32.totalorder %v932, 256
        %vm935 = vmand %vm933, %vm934
        %936 = vst.msk [vmem:[%s248] sm:$0x3] %vm935, %v930
        %s937 = sand.u32 %s117, 1
        %s938 = scalar_lea.sflag [#allocation4], %s937
        %s939 = sand.u32 %s117, 1
        %s940 = smul.addr %s939, 128
        %s941 = scalar_lea.vmem [#allocation5], %s940
        %s942 = sand.u32 %s145, 1
        %s943 = scalar_lea.sflag [#allocation7], %s942
        %s944 = sand.u32 %s145, 1
        %s945 = smul.addr %s944, 2
        %s946 = scalar_lea.vmem [#allocation6], %s945
        // Predicated region
        $region37: #{tpu_custom_call.1} parent=31 // pred_check
          %p947 = pneg %p127
        $region38: #{tpu_custom_call.1} parent=31 // pred_check_branch
          %949 = sbr.rel (%p947) target = $region40
        $region39: #{tpu_custom_call.1} parent=31 // pred_region
          %s950 = smul.u32 2, %s30
          %952 = vsyncadd %s938, 0
          %s953 = smul.addr %s29, 16
          %s954 = sadd.s32 %s950, %s953
          %s955 = smul.addr %s954, 8
          %s956 = scalar_lea.hbm %s3, %s955
          %s957 = sshll.u32 %s941, 4
          %s958 = int_to_ptr.vmem [resolvable:$true] %s957
          %s959 = sshll.u32 %s956, 4
          %s960 = int_to_ptr.hbm [resolvable:$true] %s959
          %965 = dma.vmem_to_hbm [thread:$0]  %s958, 2048, %s960, %s938, 256, 256, 16
        $region40: #{tpu_custom_call.1} parent=31 // pred_fallthru
          _
        // Predicated region
        $region41: #{tpu_custom_call.1} parent=31 // pred_check
          %p966 = pneg %p155
        $region42: #{tpu_custom_call.1} parent=31 // pred_check_branch
          %968 = sbr.rel (%p966) target = $region44
        $region43: #{tpu_custom_call.1} parent=31 // pred_region
          %970 = vsyncadd %s943, 0
          %s971 = smul.addr %s30, 2
          %s972 = smul.addr %s29, 2
          %s973 = sadd.s32 %s971, %s972
          %s974 = scalar_lea.hbm %s4, %s973
          %s976 = sshll.u32 %s946, 4
          %s977 = int_to_ptr.vmem [resolvable:$true] %s976
          %s978 = sshll.u32 %s974, 4
          %s979 = int_to_ptr.hbm [resolvable:$true] %s978
          %981 = dma.vmem_to_hbm [thread:$0]  %s977, 32, %s979, %s943
        $region44: #{tpu_custom_call.1} parent=31 // pred_fallthru
          _
      $region32: #{tpu_custom_call.1} parent=5 // pred_fallthru
        _
      %p982 = scmp.le.s32.totalorder 2, %s20
      // Predicated region
      $region45: #{tpu_custom_call.1} parent=5 // pred_check
        %p983 = pneg %p982
      $region46: #{tpu_custom_call.1} parent=5 // pred_check_branch
        %985 = sbr.rel (%p983) target = $region48
      $region47: #{tpu_custom_call.1} parent=5 // pred_region
        %s986 = ssub.s32 %s20, 2
        // Predicated region
        $region49: #{tpu_custom_call.1} parent=47 // pred_check
          %p987 = pneg %p133
        $region50: #{tpu_custom_call.1} parent=47 // pred_check_branch
          %989 = sbr.rel (%p987) target = $region52
        $region51: #{tpu_custom_call.1} parent=47 // pred_region
          %s990 = sand.u32 %s118, 1
          %s991 = scalar_lea.sflag [#allocation4], %s990
          %s992 = sand.u32 %s118, 1
          %s993 = smul.addr %s992, 128
          %s994 = scalar_lea.vmem [#allocation5], %s993
          %996 = dma.done %s991, 2048
        $region52: #{tpu_custom_call.1} parent=47 // pred_fallthru
          _
        // Predicated region
        $region53: #{tpu_custom_call.1} parent=47 // pred_check
          %p997 = pneg %p161
        $region54: #{tpu_custom_call.1} parent=47 // pred_check_branch
          %999 = sbr.rel (%p997) target = $region56
        $region55: #{tpu_custom_call.1} parent=47 // pred_region
          %s1000 = sand.u32 %s146, 1
          %s1001 = scalar_lea.sflag [#allocation7], %s1000
          %s1002 = sand.u32 %s146, 1
          %s1003 = smul.addr %s1002, 2
          %s1004 = scalar_lea.vmem [#allocation6], %s1003
          %1006 = dma.done %s1001, 32
        $region56: #{tpu_custom_call.1} parent=47 // pred_fallthru
          _
      $region48: #{tpu_custom_call.1} parent=5 // pred_fallthru
        _
    $region6: #{tpu_custom_call.1} parent=1 // loop_footer
      %s24 = sadd.s32 1, %s20
    $region7: #{tpu_custom_call.1} parent=1 // loop_footer_branch
      %19 = sbr.rel target = $region3
    $region8: #{tpu_custom_call.1} parent=1 // loop_exit
      _
    %1007 = vsyncpa [#allocation3], 1
    %s1008 = scalar_lea.sflag [#allocation3], 1
    %1009 = vsyncpa %s1008, 1
    %1010 = vsyncpa [#allocation4], 1
    %s1011 = scalar_lea.sflag [#allocation4], 1
    %1012 = vsyncpa %s1011, 1
    %1013 = vsyncpa [#allocation7], 1
    %s1014 = scalar_lea.sflag [#allocation7], 1
    %1015 = vsyncpa %s1014, 1

</llo_original>
